<compile_context>
chip_gen: v7x
topology: tpu7x:2x2x1
jax: 0.10.0
libtpu: 0.0.40
codegen_flags: <defaults>
</compile_context>

<pallas_src>
import functools

import jax
import jax.numpy as jnp
import numpy as np
from jax.experimental import pallas as pl
from jax.experimental.pallas import tpu as pltpu

EPS = 1e-5


def _conv3x3_image(x_img, w2d, left_ok, right_ok, width, matmul_dtype):
    """3x3 same-pad conv of one image as ONE MXU matmul.

    x_img: (Cin, H*W) one image, channels-major, spatial flattened (lane-dense).
    w2d:   (Cout, 9*Cin) weights in matmul_dtype, tap-major / channel-minor cols.
    left_ok/right_ok: (Cin, H*W) bool masks killing row-wrapped neighbours
                      (computed once per grid step, reused for every tap/image).
    Returns (Cout, H*W) float32 conv output.
    """
    cin, hw = x_img.shape
    xm = x_img.astype(matmul_dtype)            # early cast: taps/patches stay narrow
    zero = jnp.zeros((), xm.dtype)

    # Zero-pad the flattened image once; W+1 zeros each side cover every
    # (dy, dx) shift, so "same" padding is realised in-kernel.
    pad = jnp.zeros((cin, width + 1), xm.dtype)
    xp = jnp.concatenate([pad, xm, pad], axis=1)        # (Cin, HW + 2W + 2)

    taps = []
    for dy in (-1, 0, 1):
        for dx in (-1, 0, 1):
            start = width + 1 + dy * width + dx         # static slice offset
            t = xp[:, start:start + hw]
            if dx == -1:      # column 0 has no left neighbour
                t = jnp.where(left_ok, t, zero)
            elif dx == 1:     # last column has no right neighbour
                t = jnp.where(right_ok, t, zero)
            taps.append(t)
    patches = jnp.concatenate(taps, axis=0)             # (9*Cin, HW) im2col slab

    return jnp.dot(w2d, patches,                        # single matmul, K = 9*Cin
                   preferred_element_type=jnp.float32)  # f32 accumulation


def _column_masks(cin, hw, width):
    """Hoisted row-wrap masks: one iota + two compares per grid step."""
    col = jax.lax.broadcasted_iota(jnp.int32, (cin, hw), 1) % width
    return col >= 1, col <= width - 2


def _conv_stats_kernel(x_ref, w_ref, stats_ref, *, width, matmul_dtype):
    """Pass 1: per-batch-block BN partial statistics; conv result is NOT stored.

    x_ref:     (B, Cin, H*W)   B images (channel-padded), lane-dense.
    w_ref:     (Cout, 9*Cin)   conv weights.
    stats_ref: (Cout, 2)       [sum, sum_of_squares] over this block's images.
    """
    b, cin, hw = x_ref.shape
    cout = w_ref.shape[0]
    w2d = w_ref[...]
    left_ok, right_ok = _column_masks(cin, hw, width)

    s = jnp.zeros((cout, 1), jnp.float32)
    sq = jnp.zeros((cout, 1), jnp.float32)
    for i in range(b):                                  # static, small B
        y = _conv3x3_image(x_ref[i], w2d, left_ok, right_ok, width, matmul_dtype)
        s = s + jnp.sum(y, axis=1, keepdims=True)
        sq = sq + jnp.sum(y * y, axis=1, keepdims=True)
    stats_ref[...] = jnp.concatenate([s, sq], axis=1)


def _conv_bn_relu_kernel(x_ref, w_ref, tot_ref, gamma_ref, beta_ref, o_ref,
                         *, width, inv_count, matmul_dtype):
    """Pass 2: recompute conv, fold BN (scale/shift from totals) + ReLU, store.

    x_ref:   (B, Cin, H*W)   same images as pass 1.
    tot_ref: (Cout, 2)       global [sum, sum_sq] over all N*H*W positions.
    o_ref:   (B, Cout, H*W)  final output, lane-dense store.
    """
    b, cin, hw = x_ref.shape
    w2d = w_ref[...]

    # Fold training-mode BN into per-channel (scale, shift) in-kernel (f32).
    tot = tot_ref[...]
    mean = tot[:, 0:1] * inv_count
    var = jnp.maximum(tot[:, 1:2] * inv_count - mean * mean, 0.0)  # clamp vs cancellation
    inv = jax.lax.rsqrt(var + EPS)
    scale = gamma_ref[...] * inv                         # (Cout, 1)
    shift = beta_ref[...] - mean * scale                 # (Cout, 1)

    left_ok, right_ok = _column_masks(cin, hw, width)
    for i in range(b):                                   # static, small B
        y = _conv3x3_image(x_ref[i], w2d, left_ok, right_ok, width, matmul_dtype)
        o_ref[i] = jnp.maximum(y * scale + shift, 0.0).astype(o_ref.dtype)


def _vmem_limit_bytes():
    # Generation-aware budget: ~96 MiB on v5e/v6e (128 MiB physical VMEM),
    # ~48 MiB on v7x (64 MiB physical).  Fallback stays v7x-safe.
    try:
        cap = int(pltpu.get_tpu_info().vmem_capacity_bytes)
    except Exception:
        cap = 64 * 1024 * 1024
    return min(cap * 3 // 4, 110 * 1024 * 1024)


def _pick_batch_block(n, cin_p, cout_p, hw, width, mm_bytes, vmem_limit):
    """Images per grid step: fill the VMEM budget but keep >=2 grid steps."""
    per_img = (cin_p * hw * 4                              # x tile (input dtype f32)
               + cin_p * (hw + 2 * width + 2) * mm_bytes   # padded copy
               + 9 * cin_p * hw * mm_bytes                 # im2col slab
               + 2 * cout_p * hw * 4)                      # f32 conv result + out tile
    budget = vmem_limit // 2                               # headroom: double-buffering + weights
    max_b = max(1, budget // max(per_img, 1))
    best = 1
    for b in range(1, n + 1):
        if n % b == 0 and b <= max_b and (n // b >= 2 or n == 1):
            best = b
    return best


@functools.partial(jax.jit, static_argnames=("matmul_dtype",))
def conv_bn_relu(x_nchw, weight_oihw, gamma, beta, *, matmul_dtype=jnp.bfloat16):
    """ConvBnReLU.forward: relu(batchnorm_train(conv3x3(x, stride=1, pad=1)))."""
    n, cin, h, w = x_nchw.shape
    cout = weight_oihw.shape[0]
    hw = h * w

    mm_bytes = jnp.dtype(matmul_dtype).itemsize
    granule = 16 if mm_bytes == 2 else 8
    cin_p = -(-cin // granule) * granule     # pad Cin once in HBM (sublane granule)
    cout_p = -(-cout // 8) * 8               # pad Cout to f32 sublane granule

    # One-time parameter prep (hoisted out of the kernels): PyTorch (O,I,kh,kw)
    # -> (O_p, 9*I_p), tap-major / channel-minor, matching the im2col row order.
    w_pad = jnp.pad(weight_oihw,
                    ((0, cout_p - cout), (0, cin_p - cin), (0, 0), (0, 0)))
    w2d = jnp.transpose(w_pad, (0, 2, 3, 1)).reshape(cout_p, 9 * cin_p)
    w2d = w2d.astype(matmul_dtype)
    gamma_p = jnp.pad(gamma.astype(jnp.float32), (0, cout_p - cout),
                      constant_values=1.0).reshape(cout_p, 1)
    beta_p = jnp.pad(beta.astype(jnp.float32),
                     (0, cout_p - cout)).reshape(cout_p, 1)

    # NCHW -> (N, Cin_p, H*W): free reshape + one zero-channel pad; lane = H*W.
    x_flat = jnp.pad(x_nchw.reshape(n, cin, hw), ((0, 0), (0, cin_p - cin), (0, 0)))

    vmem_limit = _vmem_limit_bytes()
    bblk = _pick_batch_block(n, cin_p, cout_p, hw, w, mm_bytes, vmem_limit)
    nblk = n // bblk
    cparams = pltpu.CompilerParams(dimension_semantics=("parallel",),
                                   vmem_limit_bytes=vmem_limit)

    # Pass 1: per-block BN partial stats only (no y writeback), pipelined over N.
    stats = pl.pallas_call(
        functools.partial(_conv_stats_kernel, width=w, matmul_dtype=matmul_dtype),
        grid=(nblk,),
        in_specs=[
            pl.BlockSpec((bblk, cin_p, hw), lambda i: (i, 0, 0)),
            pl.BlockSpec((cout_p, 9 * cin_p), lambda i: (0, 0)),
        ],
        out_specs=pl.BlockSpec((None, cout_p, 2), lambda i: (i, 0, 0)),
        out_shape=jax.ShapeDtypeStruct((nblk, cout_p, 2), jnp.float32),
        compiler_params=cparams,
    )(x_flat, w2d)

    totals = jnp.sum(stats, axis=0)          # tiny (Cout_p, 2) cross-block reduce

    # Pass 2: recompute conv + in-kernel BN fold + ReLU; single lane-dense write.
    out = pl.pallas_call(
        functools.partial(_conv_bn_relu_kernel, width=w,
                          inv_count=1.0 / float(n * hw), matmul_dtype=matmul_dtype),
        grid=(nblk,),
        in_specs=[
            pl.BlockSpec((bblk, cin_p, hw), lambda i: (i, 0, 0)),
            pl.BlockSpec((cout_p, 9 * cin_p), lambda i: (0, 0)),
            pl.BlockSpec((cout_p, 2), lambda i: (0, 0)),
            pl.BlockSpec((cout_p, 1), lambda i: (0, 0)),
            pl.BlockSpec((cout_p, 1), lambda i: (0, 0)),
        ],
        out_specs=pl.BlockSpec((bblk, cout_p, hw), lambda i: (i, 0, 0)),
        out_shape=jax.ShapeDtypeStruct((n, cout_p, hw), jnp.float32),
        compiler_params=cparams,
    )(x_flat, w2d, totals, gamma_p, beta_p)

    return out[:, :cout, :].reshape(n, cout, h, w)


def _reference(x_nchw, weight_oihw, gamma, beta):
    """Pure-JAX reference with PyTorch ConvBnReLU (training-mode BN) semantics."""
    y = jax.lax.conv_general_dilated(
        x_nchw, weight_oihw, window_strides=(1, 1), padding=((1, 1), (1, 1)),
        dimension_numbers=("NCHW", "OIHW", "NCHW"))
    mean = jnp.mean(y, axis=(0, 2, 3), keepdims=True)
    var = jnp.mean((y - mean) ** 2, axis=(0, 2, 3), keepdims=True)
    yn = (y - mean) * jax.lax.rsqrt(var + EPS)
    yn = yn * gamma.reshape(1, -1, 1, 1) + beta.reshape(1, -1, 1, 1)
    return jnp.maximum(yn, 0.0)


if __name__ == "__main__":
    N, CIN, COUT, H, W = 2, 8, 16, 16, 16

    key = jax.random.PRNGKey(0)
    kx, kw, kg, kb = jax.random.split(key, 4)
    x = jax.random.normal(kx, (N, CIN, H, W), jnp.float32)
    weight = jax.random.normal(kw, (COUT, CIN, 3, 3), jnp.float32) * 0.1
    gamma = 1.0 + 0.1 * jax.random.normal(kg, (COUT,), jnp.float32)
    beta = 0.1 * jax.random.normal(kb, (COUT,), jnp.float32)

    ref = jax.block_until_ready(_reference(x, weight, gamma, beta))

    # f32 MXU operands: exact-semantics path, tight tolerance.
    out_f32 = jax.block_until_ready(
        conv_bn_relu(x, weight, gamma, beta, matmul_dtype=jnp.float32))
    np.testing.assert_allclose(np.asarray(out_f32), np.asarray(ref),
                               rtol=1e-3, atol=2e-3)
    assert out_f32.shape == (N, COUT, H, W) and out_f32.dtype == jnp.float32

    # Default bf16 MXU operands (native v6e/v7x MXU path).  BN statistics are
    # intentionally computed from the bf16-operand conv (f32 accumulate), so
    # tolerance vs the f32 reference is looser.
    out = jax.block_until_ready(conv_bn_relu(x, weight, gamma, beta))
    np.testing.assert_allclose(np.asarray(out), np.asarray(ref),
                               rtol=5e-2, atol=5e-2)
    assert out.shape == (N, COUT, H, W) and out.dtype == jnp.float32

    print("KERNEL_OK")
</pallas_src>

<mosaic_0001>
module attributes {stable_mosaic.version = 11 : i64} {
  func.func @_conv_stats_kernel(%arg0: i32, %arg1: memref<1x8x256xf32, #tpu.memory_space<vmem>>, %arg2: memref<16x72xf32, #tpu.memory_space<vmem>>, %arg3: memref<1x16x2xf32, #tpu.memory_space<vmem>>) attributes {dimension_semantics = [#tpu.dimension_semantics<parallel>], iteration_bounds = array<i64: 2>, scalar_prefetch = 0 : i64, scratch_operands = 0 : i64, tpu.core_type = #tpu.core_type<tc>, window_params = [{transform_indices = @transform_0, window_bounds = array<i64: 1, 8, 256>}, {pipeline_mode = #tpu.pipeline_mode<synchronous>, transform_indices = @transform_1, window_bounds = array<i64: 16, 72>}, {transform_indices = @transform_2, window_bounds = array<i64: 1, 16, 2>}]} {
    %c0 = arith.constant 0 : index
    %c0_0 = arith.constant 0 : index
    %0 = vector.load %arg2[%c0, %c0_0] : memref<16x72xf32, #tpu.memory_space<vmem>>, vector<16x72xf32>
    %1 = tpu.iota {dimensions = array<i32: 1>} : vector<8x256xi32>
    %c16_i32 = arith.constant 16 : i32
    %c0_i32 = arith.constant 0 : i32
    %2 = arith.cmpi eq, %c16_i32, %c0_i32 : i32
    %c1_i32 = arith.constant 1 : i32
    %3 = arith.select %2, %c1_i32, %c16_i32 : i32
    %4 = vector.broadcast %3 : i32 to vector<8x256xi32>
    %5 = arith.remsi %1, %4 : vector<8x256xi32>
    %c0_i32_1 = arith.constant 0 : i32
    %6 = vector.broadcast %c0_i32_1 : i32 to vector<8x256xi32>
    %7 = arith.cmpi ne, %5, %6 : vector<8x256xi32>
    %c0_i32_2 = arith.constant 0 : i32
    %8 = vector.broadcast %c0_i32_2 : i32 to vector<8x256xi32>
    %9 = arith.cmpi slt, %5, %8 : vector<8x256xi32>
    %c0_i32_3 = arith.constant 0 : i32
    %10 = arith.cmpi slt, %3, %c0_i32_3 : i32
    %11 = vector.broadcast %10 : i1 to vector<8x256xi1>
    %12 = vector.broadcast %11 : vector<8x256xi1> to vector<8x256xi1>
    %13 = arith.xori %9, %12 : vector<8x256xi1>
    %14 = arith.andi %13, %7 : vector<8x256xi1>
    %15 = vector.broadcast %3 : i32 to vector<8x256xi32>
    %16 = arith.addi %5, %15 : vector<8x256xi32>
    %17 = arith.select %14, %16, %5 : vector<8x256xi1>, vector<8x256xi32>
    %c1_i32_4 = arith.constant 1 : i32
    %18 = vector.broadcast %c1_i32_4 : i32 to vector<8x256xi32>
    %19 = arith.cmpi sge, %17, %18 : vector<8x256xi32>
    %c14_i32 = arith.constant 14 : i32
    %20 = vector.broadcast %c14_i32 : i32 to vector<8x256xi32>
    %21 = arith.cmpi sle, %17, %20 : vector<8x256xi32>
    %cst = arith.constant 0.000000e+00 : f32
    %22 = vector.broadcast %cst : f32 to vector<16x1xf32>
    %cst_5 = arith.constant 0.000000e+00 : f32
    %23 = vector.broadcast %cst_5 : f32 to vector<16x1xf32>
    %c0_6 = arith.constant 0 : index
    %c0_7 = arith.constant 0 : index
    %c0_8 = arith.constant 0 : index
    %24 = vector.load %arg1[%c0_6, %c0_7, %c0_8] : memref<1x8x256xf32, #tpu.memory_space<vmem>>, vector<1x8x256xf32>
    %25 = vector.shape_cast %24 : vector<1x8x256xf32> to vector<8x256xf32>
    %cst_9 = arith.constant 0.000000e+00 : f32
    %26 = vector.broadcast %cst_9 : f32 to vector<8x17xf32>
    %27 = tpu.concatenate %26, %25, %26 in 1 : vector<8x17xf32>, vector<8x256xf32>, vector<8x17xf32> -> vector<8x290xf32>
    %28 = vector.extract_strided_slice %27 {offsets = [0, 0], sizes = [8, 256], strides = [1, 1]} : vector<8x290xf32> to vector<8x256xf32>
    %cst_10 = arith.constant 0.000000e+00 : f32
    %29 = vector.broadcast %cst_10 : f32 to vector<8x256xf32>
    %30 = arith.select %19, %28, %29 : vector<8x256xi1>, vector<8x256xf32>
    %31 = vector.extract_strided_slice %27 {offsets = [0, 1], sizes = [8, 256], strides = [1, 1]} : vector<8x290xf32> to vector<8x256xf32>
    %32 = vector.extract_strided_slice %27 {offsets = [0, 2], sizes = [8, 256], strides = [1, 1]} : vector<8x290xf32> to vector<8x256xf32>
    %cst_11 = arith.constant 0.000000e+00 : f32
    %33 = vector.broadcast %cst_11 : f32 to vector<8x256xf32>
    %34 = arith.select %21, %32, %33 : vector<8x256xi1>, vector<8x256xf32>
    %35 = vector.extract_strided_slice %27 {offsets = [0, 16], sizes = [8, 256], strides = [1, 1]} : vector<8x290xf32> to vector<8x256xf32>
    %cst_12 = arith.constant 0.000000e+00 : f32
    %36 = vector.broadcast %cst_12 : f32 to vector<8x256xf32>
    %37 = arith.select %19, %35, %36 : vector<8x256xi1>, vector<8x256xf32>
    %38 = vector.extract_strided_slice %27 {offsets = [0, 17], sizes = [8, 256], strides = [1, 1]} : vector<8x290xf32> to vector<8x256xf32>
    %39 = vector.extract_strided_slice %27 {offsets = [0, 18], sizes = [8, 256], strides = [1, 1]} : vector<8x290xf32> to vector<8x256xf32>
    %cst_13 = arith.constant 0.000000e+00 : f32
    %40 = vector.broadcast %cst_13 : f32 to vector<8x256xf32>
    %41 = arith.select %21, %39, %40 : vector<8x256xi1>, vector<8x256xf32>
    %42 = vector.extract_strided_slice %27 {offsets = [0, 32], sizes = [8, 256], strides = [1, 1]} : vector<8x290xf32> to vector<8x256xf32>
    %cst_14 = arith.constant 0.000000e+00 : f32
    %43 = vector.broadcast %cst_14 : f32 to vector<8x256xf32>
    %44 = arith.select %19, %42, %43 : vector<8x256xi1>, vector<8x256xf32>
    %45 = vector.extract_strided_slice %27 {offsets = [0, 33], sizes = [8, 256], strides = [1, 1]} : vector<8x290xf32> to vector<8x256xf32>
    %46 = vector.extract_strided_slice %27 {offsets = [0, 34], sizes = [8, 256], strides = [1, 1]} : vector<8x290xf32> to vector<8x256xf32>
    %cst_15 = arith.constant 0.000000e+00 : f32
    %47 = vector.broadcast %cst_15 : f32 to vector<8x256xf32>
    %48 = arith.select %21, %46, %47 : vector<8x256xi1>, vector<8x256xf32>
    %49 = tpu.concatenate %30, %31, %34, %37, %38, %41, %44, %45, %48 in 0 : vector<8x256xf32>, vector<8x256xf32>, vector<8x256xf32>, vector<8x256xf32>, vector<8x256xf32>, vector<8x256xf32>, vector<8x256xf32>, vector<8x256xf32>, vector<8x256xf32> -> vector<72x256xf32>
    %cst_16 = arith.constant dense<0.000000e+00> : vector<16x256xf32>
    %50 = tpu.matmul %0, %49, %cst_16 {dimension_numbers = #tpu.dot_dimension_numbers<[1], [0], [0], [1], [0, 0, 1, 1], [], []>} : vector<16x72xf32>, vector<72x256xf32>, vector<16x256xf32> -> vector<16x256xf32>
    %cst_17 = arith.constant dense<0.000000e+00> : vector<16xf32>
    %51 = vector.multi_reduction <add>, %50, %cst_17 [1] : vector<16x256xf32> to vector<16xf32>
    %52 = vector.shape_cast %51 : vector<16xf32> to vector<16x1xf32>
    %53 = arith.addf %22, %52 : vector<16x1xf32>
    %54 = arith.mulf %50, %50 : vector<16x256xf32>
    %cst_18 = arith.constant dense<0.000000e+00> : vector<16xf32>
    %55 = vector.multi_reduction <add>, %54, %cst_18 [1] : vector<16x256xf32> to vector<16xf32>
    %56 = vector.shape_cast %55 : vector<16xf32> to vector<16x1xf32>
    %57 = arith.addf %23, %56 : vector<16x1xf32>
    %58 = tpu.concatenate %53, %57 in 1 : vector<16x1xf32>, vector<16x1xf32> -> vector<16x2xf32>
    %c0_19 = arith.constant 0 : index
    %c0_20 = arith.constant 0 : index
    %c0_21 = arith.constant 0 : index
    %59 = vector.load %arg3[%c0_19, %c0_20, %c0_21] : memref<1x16x2xf32, #tpu.memory_space<vmem>>, vector<1x16x2xf32>
    %60 = vector.shape_cast %59 : vector<1x16x2xf32> to vector<16x2xf32>
    %61 = vector.shape_cast %58 : vector<16x2xf32> to vector<1x16x2xf32>
    tpu.vector_store %arg3[%c0_19, %c0_20, %c0_21], %61 {strides = array<i32>} : memref<1x16x2xf32, #tpu.memory_space<vmem>>, vector<1x16x2xf32>,
    return
  }
  func.func @transform_0(%arg0: i32) -> (i32, i32, i32) {
    %c0_i32 = arith.constant 0 : i32
    %c0_i32_0 = arith.constant 0 : i32
    %c0_i32_1 = arith.constant 0 : i32
    return %arg0, %c0_i32, %c0_i32_0 : i32, i32, i32
  }
  func.func @transform_1(%arg0: i32) -> (i32, i32) {
    %c0_i32 = arith.constant 0 : i32
    %c0_i32_0 = arith.constant 0 : i32
    %c0_i32_1 = arith.constant 0 : i32
    return %c0_i32, %c0_i32_0 : i32, i32
  }
  func.func @transform_2(%arg0: i32) -> (i32, i32, i32) {
    %c0_i32 = arith.constant 0 : i32
    %c0_i32_0 = arith.constant 0 : i32
    %c0_i32_1 = arith.constant 0 : i32
    return %arg0, %c0_i32, %c0_i32_0 : i32, i32, i32
  }
}

module attributes {stable_mosaic.version = 11 : i64} {
  func.func @_conv_bn_relu_kernel(%arg0: i32, %arg1: memref<1x8x256xf32, #tpu.memory_space<vmem>>, %arg2: memref<16x72xf32, #tpu.memory_space<vmem>>, %arg3: memref<16x2xf32, #tpu.memory_space<vmem>>, %arg4: memref<16x1xf32, #tpu.memory_space<vmem>>, %arg5: memref<16x1xf32, #tpu.memory_space<vmem>>, %arg6: memref<1x16x256xf32, #tpu.memory_space<vmem>>) attributes {dimension_semantics = [#tpu.dimension_semantics<parallel>], iteration_bounds = array<i64: 2>, scalar_prefetch = 0 : i64, scratch_operands = 0 : i64, tpu.core_type = #tpu.core_type<tc>, window_params = [{transform_indices = @transform_0, window_bounds = array<i64: 1, 8, 256>}, {pipeline_mode = #tpu.pipeline_mode<synchronous>, transform_indices = @transform_1, window_bounds = array<i64: 16, 72>}, {pipeline_mode = #tpu.pipeline_mode<synchronous>, transform_indices = @transform_2, window_bounds = array<i64: 16, 2>}, {pipeline_mode = #tpu.pipeline_mode<synchronous>, transform_indices = @transform_3, window_bounds = array<i64: 16, 1>}, {pipeline_mode = #tpu.pipeline_mode<synchronous>, transform_indices = @transform_4, window_bounds = array<i64: 16, 1>}, {transform_indices = @transform_5, window_bounds = array<i64: 1, 16, 256>}]} {
    %c0 = arith.constant 0 : index
    %c0_0 = arith.constant 0 : index
    %0 = vector.load %arg2[%c0, %c0_0] : memref<16x72xf32, #tpu.memory_space<vmem>>, vector<16x72xf32>
    %c0_1 = arith.constant 0 : index
    %c0_2 = arith.constant 0 : index
    %1 = vector.load %arg3[%c0_1, %c0_2] : memref<16x2xf32, #tpu.memory_space<vmem>>, vector<16x2xf32>
    %2 = vector.extract_strided_slice %1 {offsets = [0, 0], sizes = [16, 1], strides = [1, 1]} : vector<16x2xf32> to vector<16x1xf32>
    %cst = arith.constant 0.001953125 : f32
    %3 = vector.broadcast %cst : f32 to vector<16x1xf32>
    %4 = arith.mulf %2, %3 : vector<16x1xf32>
    %5 = vector.extract_strided_slice %1 {offsets = [0, 1], sizes = [16, 1], strides = [1, 1]} : vector<16x2xf32> to vector<16x1xf32>
    %cst_3 = arith.constant 0.001953125 : f32
    %6 = vector.broadcast %cst_3 : f32 to vector<16x1xf32>
    %7 = arith.mulf %5, %6 : vector<16x1xf32>
    %8 = arith.mulf %4, %4 : vector<16x1xf32>
    %9 = arith.subf %7, %8 : vector<16x1xf32>
    %cst_4 = arith.constant 0.000000e+00 : f32
    %10 = vector.broadcast %cst_4 : f32 to vector<16x1xf32>
    %11 = arith.maximumf %9, %10 : vector<16x1xf32>
    %cst_5 = arith.constant 9.99999974E-6 : f32
    %12 = vector.broadcast %cst_5 : f32 to vector<16x1xf32>
    %13 = arith.addf %11, %12 : vector<16x1xf32>
    %14 = math.rsqrt %13 : vector<16x1xf32>
    %c0_6 = arith.constant 0 : index
    %c0_7 = arith.constant 0 : index
    %15 = vector.load %arg4[%c0_6, %c0_7] : memref<16x1xf32, #tpu.memory_space<vmem>>, vector<16x1xf32>
    %16 = arith.mulf %15, %14 : vector<16x1xf32>
    %c0_8 = arith.constant 0 : index
    %c0_9 = arith.constant 0 : index
    %17 = vector.load %arg5[%c0_8, %c0_9] : memref<16x1xf32, #tpu.memory_space<vmem>>, vector<16x1xf32>
    %18 = arith.mulf %4, %16 : vector<16x1xf32>
    %19 = arith.subf %17, %18 : vector<16x1xf32>
    %20 = tpu.iota {dimensions = array<i32: 1>} : vector<8x256xi32>
    %c16_i32 = arith.constant 16 : i32
    %c0_i32 = arith.constant 0 : i32
    %21 = arith.cmpi eq, %c16_i32, %c0_i32 : i32
    %c1_i32 = arith.constant 1 : i32
    %22 = arith.select %21, %c1_i32, %c16_i32 : i32
    %23 = vector.broadcast %22 : i32 to vector<8x256xi32>
    %24 = arith.remsi %20, %23 : vector<8x256xi32>
    %c0_i32_10 = arith.constant 0 : i32
    %25 = vector.broadcast %c0_i32_10 : i32 to vector<8x256xi32>
    %26 = arith.cmpi ne, %24, %25 : vector<8x256xi32>
    %c0_i32_11 = arith.constant 0 : i32
    %27 = vector.broadcast %c0_i32_11 : i32 to vector<8x256xi32>
    %28 = arith.cmpi slt, %24, %27 : vector<8x256xi32>
    %c0_i32_12 = arith.constant 0 : i32
    %29 = arith.cmpi slt, %22, %c0_i32_12 : i32
    %30 = vector.broadcast %29 : i1 to vector<8x256xi1>
    %31 = vector.broadcast %30 : vector<8x256xi1> to vector<8x256xi1>
    %32 = arith.xori %28, %31 : vector<8x256xi1>
    %33 = arith.andi %32, %26 : vector<8x256xi1>
    %34 = vector.broadcast %22 : i32 to vector<8x256xi32>
    %35 = arith.addi %24, %34 : vector<8x256xi32>
    %36 = arith.select %33, %35, %24 : vector<8x256xi1>, vector<8x256xi32>
    %c1_i32_13 = arith.constant 1 : i32
    %37 = vector.broadcast %c1_i32_13 : i32 to vector<8x256xi32>
    %38 = arith.cmpi sge, %36, %37 : vector<8x256xi32>
    %c14_i32 = arith.constant 14 : i32
    %39 = vector.broadcast %c14_i32 : i32 to vector<8x256xi32>
    %40 = arith.cmpi sle, %36, %39 : vector<8x256xi32>
    %c0_14 = arith.constant 0 : index
    %c0_15 = arith.constant 0 : index
    %c0_16 = arith.constant 0 : index
    %41 = vector.load %arg1[%c0_14, %c0_15, %c0_16] : memref<1x8x256xf32, #tpu.memory_space<vmem>>, vector<1x8x256xf32>
    %42 = vector.shape_cast %41 : vector<1x8x256xf32> to vector<8x256xf32>
    %cst_17 = arith.constant 0.000000e+00 : f32
    %43 = vector.broadcast %cst_17 : f32 to vector<8x17xf32>
    %44 = tpu.concatenate %43, %42, %43 in 1 : vector<8x17xf32>, vector<8x256xf32>, vector<8x17xf32> -> vector<8x290xf32>
    %45 = vector.extract_strided_slice %44 {offsets = [0, 0], sizes = [8, 256], strides = [1, 1]} : vector<8x290xf32> to vector<8x256xf32>
    %cst_18 = arith.constant 0.000000e+00 : f32
    %46 = vector.broadcast %cst_18 : f32 to vector<8x256xf32>
    %47 = arith.select %38, %45, %46 : vector<8x256xi1>, vector<8x256xf32>
    %48 = vector.extract_strided_slice %44 {offsets = [0, 1], sizes = [8, 256], strides = [1, 1]} : vector<8x290xf32> to vector<8x256xf32>
    %49 = vector.extract_strided_slice %44 {offsets = [0, 2], sizes = [8, 256], strides = [1, 1]} : vector<8x290xf32> to vector<8x256xf32>
    %cst_19 = arith.constant 0.000000e+00 : f32
    %50 = vector.broadcast %cst_19 : f32 to vector<8x256xf32>
    %51 = arith.select %40, %49, %50 : vector<8x256xi1>, vector<8x256xf32>
    %52 = vector.extract_strided_slice %44 {offsets = [0, 16], sizes = [8, 256], strides = [1, 1]} : vector<8x290xf32> to vector<8x256xf32>
    %cst_20 = arith.constant 0.000000e+00 : f32
    %53 = vector.broadcast %cst_20 : f32 to vector<8x256xf32>
    %54 = arith.select %38, %52, %53 : vector<8x256xi1>, vector<8x256xf32>
    %55 = vector.extract_strided_slice %44 {offsets = [0, 17], sizes = [8, 256], strides = [1, 1]} : vector<8x290xf32> to vector<8x256xf32>
    %56 = vector.extract_strided_slice %44 {offsets = [0, 18], sizes = [8, 256], strides = [1, 1]} : vector<8x290xf32> to vector<8x256xf32>
    %cst_21 = arith.constant 0.000000e+00 : f32
    %57 = vector.broadcast %cst_21 : f32 to vector<8x256xf32>
    %58 = arith.select %40, %56, %57 : vector<8x256xi1>, vector<8x256xf32>
    %59 = vector.extract_strided_slice %44 {offsets = [0, 32], sizes = [8, 256], strides = [1, 1]} : vector<8x290xf32> to vector<8x256xf32>
    %cst_22 = arith.constant 0.000000e+00 : f32
    %60 = vector.broadcast %cst_22 : f32 to vector<8x256xf32>
    %61 = arith.select %38, %59, %60 : vector<8x256xi1>, vector<8x256xf32>
    %62 = vector.extract_strided_slice %44 {offsets = [0, 33], sizes = [8, 256], strides = [1, 1]} : vector<8x290xf32> to vector<8x256xf32>
    %63 = vector.extract_strided_slice %44 {offsets = [0, 34], sizes = [8, 256], strides = [1, 1]} : vector<8x290xf32> to vector<8x256xf32>
    %cst_23 = arith.constant 0.000000e+00 : f32
    %64 = vector.broadcast %cst_23 : f32 to vector<8x256xf32>
    %65 = arith.select %40, %63, %64 : vector<8x256xi1>, vector<8x256xf32>
    %66 = tpu.concatenate %47, %48, %51, %54, %55, %58, %61, %62, %65 in 0 : vector<8x256xf32>, vector<8x256xf32>, vector<8x256xf32>, vector<8x256xf32>, vector<8x256xf32>, vector<8x256xf32>, vector<8x256xf32>, vector<8x256xf32>, vector<8x256xf32> -> vector<72x256xf32>
    %cst_24 = arith.constant dense<0.000000e+00> : vector<16x256xf32>
    %67 = tpu.matmul %0, %66, %cst_24 {dimension_numbers = #tpu.dot_dimension_numbers<[1], [0], [0], [1], [0, 0, 1, 1], [], []>} : vector<16x72xf32>, vector<72x256xf32>, vector<16x256xf32> -> vector<16x256xf32>
    %68 = vector.broadcast %16 : vector<16x1xf32> to vector<16x256xf32>
    %69 = arith.mulf %67, %68 : vector<16x256xf32>
    %70 = vector.broadcast %19 : vector<16x1xf32> to vector<16x256xf32>
    %71 = arith.addf %69, %70 : vector<16x256xf32>
    %cst_25 = arith.constant 0.000000e+00 : f32
    %72 = vector.broadcast %cst_25 : f32 to vector<16x256xf32>
    %73 = arith.maximumf %71, %72 : vector<16x256xf32>
    %c0_26 = arith.constant 0 : index
    %c0_27 = arith.constant 0 : index
    %c0_28 = arith.constant 0 : index
    %74 = vector.load %arg6[%c0_26, %c0_27, %c0_28] : memref<1x16x256xf32, #tpu.memory_space<vmem>>, vector<1x16x256xf32>
    %75 = vector.shape_cast %74 : vector<1x16x256xf32> to vector<16x256xf32>
    %76 = vector.shape_cast %73 : vector<16x256xf32> to vector<1x16x256xf32>
    tpu.vector_store %arg6[%c0_26, %c0_27, %c0_28], %76 {strides = array<i32>} : memref<1x16x256xf32, #tpu.memory_space<vmem>>, vector<1x16x256xf32>,
    return
  }
  func.func @transform_0(%arg0: i32) -> (i32, i32, i32) {
    %c0_i32 = arith.constant 0 : i32
    %c0_i32_0 = arith.constant 0 : i32
    %c0_i32_1 = arith.constant 0 : i32
    return %arg0, %c0_i32, %c0_i32_0 : i32, i32, i32
  }
  func.func @transform_1(%arg0: i32) -> (i32, i32) {
    %c0_i32 = arith.constant 0 : i32
    %c0_i32_0 = arith.constant 0 : i32
    %c0_i32_1 = arith.constant 0 : i32
    return %c0_i32, %c0_i32_0 : i32, i32
  }
  func.func @transform_2(%arg0: i32) -> (i32, i32) {
    %c0_i32 = arith.constant 0 : i32
    %c0_i32_0 = arith.constant 0 : i32
    %c0_i32_1 = arith.constant 0 : i32
    return %c0_i32, %c0_i32_0 : i32, i32
  }
  func.func @transform_3(%arg0: i32) -> (i32, i32) {
    %c0_i32 = arith.constant 0 : i32
    %c0_i32_0 = arith.constant 0 : i32
    %c0_i32_1 = arith.constant 0 : i32
    return %c0_i32, %c0_i32_0 : i32, i32
  }
  func.func @transform_4(%arg0: i32) -> (i32, i32) {
    %c0_i32 = arith.constant 0 : i32
    %c0_i32_0 = arith.constant 0 : i32
    %c0_i32_1 = arith.constant 0 : i32
    return %c0_i32, %c0_i32_0 : i32, i32
  }
  func.func @transform_5(%arg0: i32) -> (i32, i32, i32) {
    %c0_i32 = arith.constant 0 : i32
    %c0_i32_0 = arith.constant 0 : i32
    %c0_i32_1 = arith.constant 0 : i32
    return %arg0, %c0_i32, %c0_i32_0 : i32, i32, i32
  }
}

</mosaic_0001>

<llo_original>
// kernel: conv_bn_relu.2
$region0: #{conv_bn_relu.2}
  #allocation0 [shape = 'u32[]', space=smem, size = 0x4, offset = 0x4, fixed_abs, tag = 'smem constant byte address 0x4 - core index']
  #allocation1 [shape = 'u32[144,128]{1,0:T(1,128)}', space=vmem, size = 0x12000, scoped, tag = 'internal scratch']
  %s0 = inlined_call_operand.vmem [shape: f32[2,8,256], index: 0, kind: input, shape index: {}]
  %s1 = inlined_call_operand.vmem [shape: f32[16,72], index: 1, kind: input, shape index: {}]
  %s2 = inlined_call_operand.vmem [shape: f32[2,16,2], index: 2, kind: output, shape index: {}]
  %s3 = sld [smem:[#allocation0]]
  $region41: #{conv_bn_relu.2} parent=0
    _
  %s5 = ssub.s32 1, %s3
  %s6 = scalar_select 0, %s5, %s3
  loop: start=0, step=1, limit=4
  $region2: #{conv_bn_relu.2} parent=0 // loop_pre_header
    _
  $region3: #{conv_bn_relu.2} parent=0 // loop_header
    %s8 = sphi 0, %s12
    %p9 = scmp.ge.s32.totalorder %s8, 4
    %s18 = sphi 0, %s20
    %s21 = sphi 0, %s18
    %s22 = sphi 0, %s21
    %s38 = sphi 0, %s22
    %s42 = sphi 0, %s42
    %s44 = sphi 0, %s42
    %s45 = sphi 0, %s44
    %s59 = sphi 0, %s45
    %s65 = sphi 0, %s67
    %s68 = sphi 0, %s65
    %s69 = sphi 0, %s68
    %s85 = sphi 0, %s69
  $region4: #{conv_bn_relu.2} parent=0 // loop_header_branch
    %11 = sbr.rel (%p9) target = $region8
  $region5: #{conv_bn_relu.2} parent=0 // loop_body
    %s13 = ssub.s32 %s8, 1
    %s14 = ssub.s32 %s8, 2
    %s15 = sadd.s32 %s8, 1
    %s16 = ssub.s32 %s8, %s15
    %p17 = scmp.eq.s32.totalorder %s16, 0
    %s19 = sadd.s32 %s18, 1
    %s20 = scalar_select %p17, %s18, %s19
    %p23 = pneg %p17
    %p24 = scmp.eq.s32.totalorder %s8, 1
    %p25 = por %p23, %p24
    %p26 = scmp.ne.s32.totalorder %s18, %s21
    %p27 = scmp.eq.s32.totalorder %s8, 0
    %p28 = por %p26, %p27
    %p29 = scmp.ne.s32.totalorder %s18, %s21
    %p30 = scmp.eq.s32.totalorder %s13, 1
    %p31 = por %p29, %p30
    %p32 = scmp.ne.s32.totalorder %s21, %s22
    %p33 = scmp.eq.s32.totalorder %s13, 0
    %p34 = por %p32, %p33
    %p35 = scmp.ne.s32.totalorder %s21, %s22
    %p36 = scmp.eq.s32.totalorder %s14, 1
    %p37 = por %p35, %p36
    %p39 = scmp.ne.s32.totalorder %s22, %s38
    %p40 = scmp.eq.s32.totalorder %s14, 0
    %p41 = por %p39, %p40
    %s43 = sadd.s32 %s42, 1
    %p46 = scmp.eq.s32.totalorder %s8, 1
    %p47 = scmp.ne.s32.totalorder %s42, %s44
    %p48 = scmp.eq.s32.totalorder %s8, 0
    %p49 = por %p47, %p48
    %p50 = scmp.ne.s32.totalorder %s42, %s44
    %p51 = scmp.eq.s32.totalorder %s13, 1
    %p52 = por %p50, %p51
    %p53 = scmp.ne.s32.totalorder %s44, %s45
    %p54 = scmp.eq.s32.totalorder %s13, 0
    %p55 = por %p53, %p54
    %p56 = scmp.ne.s32.totalorder %s44, %s45
    %p57 = scmp.eq.s32.totalorder %s14, 1
    %p58 = por %p56, %p57
    %p60 = scmp.ne.s32.totalorder %s45, %s59
    %p61 = scmp.eq.s32.totalorder %s14, 0
    %p62 = por %p60, %p61
    %s63 = ssub.s32 %s8, %s15
    %p64 = scmp.eq.s32.totalorder %s63, 0
    %s66 = sadd.s32 %s65, 1
    %s67 = scalar_select %p64, %s65, %s66
    %p70 = pneg %p64
    %p71 = scmp.eq.s32.totalorder %s8, 1
    %p72 = por %p70, %p71
    %p73 = scmp.ne.s32.totalorder %s65, %s68
    %p74 = scmp.eq.s32.totalorder %s8, 0
    %p75 = por %p73, %p74
    %p76 = scmp.ne.s32.totalorder %s65, %s68
    %p77 = scmp.eq.s32.totalorder %s13, 1
    %p78 = por %p76, %p77
    %p79 = scmp.ne.s32.totalorder %s68, %s69
    %p80 = scmp.eq.s32.totalorder %s13, 0
    %p81 = por %p79, %p80
    %p82 = scmp.ne.s32.totalorder %s68, %s69
    %p83 = scmp.eq.s32.totalorder %s14, 1
    %p84 = por %p82, %p83
    %p86 = scmp.ne.s32.totalorder %s69, %s85
    %p87 = scmp.eq.s32.totalorder %s14, 0
    %p88 = por %p86, %p87
    %p89 = scmp.le.s32.totalorder 1, %s8
    %p90 = scmp.lt.s32.totalorder %s8, 3
    %p91 = pnand %p89, %p90
    %p92 = pneg %p91
    // Predicated region
    $region9: #{conv_bn_relu.2} parent=5 // pred_check
      _
    $region10: #{conv_bn_relu.2} parent=5 // pred_check_branch
      %94 = sbr.rel (%p91) target = $region12
    $region11: #{conv_bn_relu.2} parent=5 // pred_region
      %s95 = ssub.s32 %s8, 1
      // Predicated region
      $region13: #{conv_bn_relu.2} parent=11 // pred_check
        %p96 = pneg %p55
      $region14: #{conv_bn_relu.2} parent=11 // pred_check_branch
        %98 = sbr.rel (%p96) target = $region16
      $region15: #{conv_bn_relu.2} parent=11 // pred_region
        _
      $region16: #{conv_bn_relu.2} parent=11 // pred_fallthru
        _
    $region12: #{conv_bn_relu.2} parent=5 // pred_fallthru
      _
    %p99 = scmp.lt.s32.totalorder %s8, 2
    // Predicated region
    $region17: #{conv_bn_relu.2} parent=5 // pred_check
      %p100 = pneg %p99
    $region18: #{conv_bn_relu.2} parent=5 // pred_check_branch
      %102 = sbr.rel (%p100) target = $region20
    $region19: #{conv_bn_relu.2} parent=5 // pred_region
      // Predicated region
      $region21: #{conv_bn_relu.2} parent=19 // pred_check
        %p103 = pneg %p28
      $region22: #{conv_bn_relu.2} parent=19 // pred_check_branch
        %105 = sbr.rel (%p103) target = $region24
      $region23: #{conv_bn_relu.2} parent=19 // pred_region
        %p106 = scmp.lt.s32.totalorder %s8, 1
        %s107 = scalar_select %p106, %s8, 1
        %s108 = smul.addr %s107, 2
        %s109 = smul.addr %s108, 8
        %s110 = scalar_lea.vmem %s0, %s109
      $region24: #{conv_bn_relu.2} parent=19 // pred_fallthru
        _
    $region20: #{conv_bn_relu.2} parent=5 // pred_fallthru
      _
    %p111 = scmp.le.s32.totalorder 1, %s8
    %p112 = scmp.lt.s32.totalorder %s8, 3
    %p113 = pnand %p111, %p112
    %p114 = pneg %p113
    // Predicated region
    $region25: #{conv_bn_relu.2} parent=5 // pred_check
      _
    $region26: #{conv_bn_relu.2} parent=5 // pred_check_branch
      %116 = sbr.rel (%p113) target = $region28
    $region27: #{conv_bn_relu.2} parent=5 // pred_region
      %s117 = ssub.s32 %s8, 1
      %p118 = scmp.lt.s32.totalorder %s13, 1
      %s119 = scalar_select %p118, %s13, 1
      %s120 = smul.addr %s119, 2
      %s121 = smul.addr %s120, 8
      %s122 = scalar_lea.vmem %s0, %s121
      %p123 = pneg %p34
      %p124 = pneg %p31
      %p125 = pneg %p55
      %p126 = pneg %p52
      %p127 = pneg %p81
      %p128 = pneg %p78
      %p129 = scmp.lt.s32.totalorder %s13, 1
      %s130 = scalar_select %p129, %s13, 1
      %s131 = smul.addr %s130, 2
      %s132 = smul.addr %s131, 8
      %s133 = scalar_lea.vmem %s2, %s132
      %p134 = scmp.lt.s32.totalorder %s13, 1
      %s135 = scalar_select %p134, %s13, 1
      %s136 = smul.addr %s135, 2
      %s137 = smul.addr %s136, 8
      %s138 = scalar_lea.vmem %s0, %s137
      %p139 = scmp.lt.s32.totalorder %s13, 1
      %s140 = scalar_select %p139, %s13, 1
      %s141 = smul.addr %s140, 2
      %s142 = smul.addr %s141, 8
      %s143 = scalar_lea.vmem %s2, %s142
      %v144 = vld [vmem:[%s1] sm:$0xff]
      %v145 = vld [vmem:[%s1 + $0x8] sm:$0xff]
      %v146 = vlaneseq
      %v147 = vand.u32 %v146, 127
      %v148 = vadd.s32 %v147, 128
      %vm149 = vcmp.lt.s32.totalorder %v147, 0
      %v150 = vsub.s32 0, %v147
      %v151 = vsel %vm149, %v150, %v147
      %v152 = vshrl.u32 %v151, 4
      %v153 = vand.u32 %v151, 15
      %v154 = vsub.s32 0, %v153
      %v155 = vsel %vm149, %v154, %v153
      %vm156 = vcmp.lt.s32.totalorder %v148, 0
      %v157 = vsub.s32 0, %v148
      %v158 = vsel %vm156, %v157, %v148
      %v159 = vshrl.u32 %v158, 4
      %v160 = vand.u32 %v158, 15
      %v161 = vsub.s32 0, %v160
      %v162 = vsel %vm156, %v161, %v160
      %vm163 = vcmp.ne.s32.totalorder %v155, 0
      %vm164 = vcmp.ne.s32.totalorder %v162, 0
      %vm165 = vcmp.lt.s32.totalorder %v155, 0
      %vm166 = vcmp.lt.s32.totalorder %v162, 0
      %vm167 = vmand %vm165, %vm163
      %vm168 = vmand %vm166, %vm164
      %v169 = vadd.s32 %v155, 16
      %v170 = vadd.s32 %v162, 16
      %v171 = vsel %vm167, %v169, %v155
      %v172 = vsel %vm168, %v170, %v162
      %vm173 = vcmp.ge.s32.totalorder %v171, 1
      %vm174 = vcmp.ge.s32.totalorder %v172, 1
      %vm175 = vcmp.le.s32.totalorder %v171, 14
      %vm176 = vcmp.le.s32.totalorder %v172, 14
      %v177 = vld [vmem:[%s138] sm:$0xff]
      %v178 = vld [vmem:[%s138 + $0x8] sm:$0xff]
      %181 = vrot.lane.b32.xlu0 %v177, 17
      %v182 = vpop.permute.xlu0 %181
      %183 = vrot.lane.b32.xlu0 %v178, 17
      %v184 = vpop.permute.xlu0 %183
      %vm185 = vcmask 138240
      %v186 = vsel %vm185, %v182, %v184
      %v190 = vsel %vm185, 0.0, %v182
      %v191 = vsel %vm185, %v184, 0.0
      %v192 = vsel %vm173, %v190, 0.0
      %v193 = vsel %vm174, %v186, 0.0
      %196 = vrot.lane.b32.xlu0 %v190, 126
      %v197 = vpop.permute.xlu0 %196
      %198 = vrot.lane.b32.xlu0 %v186, 126
      %v199 = vpop.permute.xlu0 %198
      %200 = vrot.lane.b32.xlu0 %v191, 126
      %v201 = vpop.permute.xlu0 %200
      %vm202 = vcmask 1031168
      %v203 = vsel %vm202, %v197, %v199
      %v204 = vsel %vm202, %v199, %v201
      %v207 = vsel %vm175, %v203, 0.0
      %v208 = vsel %vm176, %v204, 0.0
      %209 = vrot.lane.b32.xlu0 %v190, 112
      %v210 = vpop.permute.xlu0 %209
      %211 = vrot.lane.b32.xlu0 %v186, 112
      %v212 = vpop.permute.xlu0 %211
      %213 = vrot.lane.b32.xlu0 %v191, 112
      %v214 = vpop.permute.xlu0 %213
      %vm215 = vcmask 916480
      %v216 = vsel %vm215, %v210, %v212
      %v217 = vsel %vm215, %v212, %v214
      %v220 = vsel %vm173, %v216, 0.0
      %v221 = vsel %vm174, %v217, 0.0
      %222 = vrot.lane.b32.xlu0 %v190, 110
      %v223 = vpop.permute.xlu0 %222
      %224 = vrot.lane.b32.xlu0 %v186, 110
      %v225 = vpop.permute.xlu0 %224
      %226 = vrot.lane.b32.xlu0 %v191, 110
      %v227 = vpop.permute.xlu0 %226
      %vm228 = vcmask 900096
      %v229 = vsel %vm228, %v223, %v225
      %v230 = vsel %vm228, %v225, %v227
      %v233 = vsel %vm175, %v229, 0.0
      %v234 = vsel %vm176, %v230, 0.0
      %235 = vrot.lane.b32.xlu0 %v190, 96
      %v236 = vpop.permute.xlu0 %235
      %237 = vrot.lane.b32.xlu0 %v186, 96
      %v238 = vpop.permute.xlu0 %237
      %239 = vrot.lane.b32.xlu0 %v191, 96
      %v240 = vpop.permute.xlu0 %239
      %vm241 = vcmask 785408
      %v242 = vsel %vm241, %v236, %v238
      %v243 = vsel %vm241, %v238, %v240
      %v246 = vsel %vm173, %v242, 0.0
      %v247 = vsel %vm174, %v243, 0.0
      %248 = vrot.lane.b32.xlu0 %v190, 94
      %v249 = vpop.permute.xlu0 %248
      %250 = vrot.lane.b32.xlu0 %v186, 94
      %v251 = vpop.permute.xlu0 %250
      %252 = vrot.lane.b32.xlu0 %v191, 94
      %v253 = vpop.permute.xlu0 %252
      %vm254 = vcmask 769024
      %v255 = vsel %vm254, %v249, %v251
      %v256 = vsel %vm254, %v251, %v253
      %v259 = vsel %vm175, %v255, 0.0
      %v260 = vsel %vm176, %v256, 0.0
      %261 = vrot.lane.b32.xlu0 %v190, 127
      %v262 = vpop.permute.xlu0 %261
      %263 = vrot.lane.b32.xlu0 %v186, 127
      %v264 = vpop.permute.xlu0 %263
      %265 = vrot.lane.b32.xlu0 %v191, 127
      %v266 = vpop.permute.xlu0 %265
      %vm267 = vcmask 1039360
      %v268 = vsel %vm267, %v262, %v264
      %v269 = vsel %vm267, %v264, %v266
      %272 = vrot.lane.b32.xlu0 %v190, 111
      %v273 = vpop.permute.xlu0 %272
      %274 = vrot.lane.b32.xlu0 %v186, 111
      %v275 = vpop.permute.xlu0 %274
      %276 = vrot.lane.b32.xlu0 %v191, 111
      %v277 = vpop.permute.xlu0 %276
      %vm278 = vcmask 908288
      %v279 = vsel %vm278, %v273, %v275
      %v280 = vsel %vm278, %v275, %v277
      %283 = vrot.lane.b32.xlu0 %v190, 95
      %v284 = vpop.permute.xlu0 %283
      %285 = vrot.lane.b32.xlu0 %v186, 95
      %v286 = vpop.permute.xlu0 %285
      %287 = vrot.lane.b32.xlu0 %v191, 95
      %v288 = vpop.permute.xlu0 %287
      %vm289 = vcmask 777216
      %v290 = vsel %vm289, %v284, %v286
      %v291 = vsel %vm289, %v286, %v288
      %vm294 = vcmask 588800
      %v296 = vsel %vm294, %v144, 0
      %v299 = vsel %vm294, %v145, 0
      %301 = vmatprep.subr.mxu0 %v193
      %302 = vmatpush1.msra.mxu0 %v192
      %303 = vmatprep.subr.mxu0 %v269
      %304 = vmatpush1.msra.mxu0 %v268
      %305 = vmatprep.subr.mxu0 %v208
      %306 = vmatpush1.msra.mxu0 %v207
      %307 = vmatprep.subr.mxu0 %v221
      %308 = vmatpush1.msra.mxu0 %v220
      %309 = vmatprep.subr.mxu0 %v280
      %310 = vmatpush1.msra.mxu0 %v279
      %311 = vmatprep.subr.mxu0 %v234
      %312 = vmatpush1.msra.mxu0 %v233
      %313 = vmatprep.subr.mxu0 %v247
      %314 = vmatpush1.msra.mxu0 %v246
      %315 = vmatprep.subr.mxu0 %v291
      %316 = vmatpush1.msra.mxu0 %v290
      %317 = vmatprep.subr.mxu0 %v260
      %318 = vmatpush1.msra.mxu0 %v259
      %319 = vmatprep.subr.mxu0 0.0
      %320 = vmatpush1.msra.mxu0 0.0
      %321 = vmatprep.subr.mxu0 0.0
      %322 = vmatpush1.msra.mxu0 0.0
      %323 = vmatprep.subr.mxu0 0.0
      %324 = vmatpush1.msra.mxu0 0.0
      %325 = vmatprep.subr.mxu0 0.0
      %326 = vmatpush1.msra.mxu0 0.0
      %327 = vmatprep.subr.mxu0 0.0
      %328 = vmatpush1.msra.mxu0 0.0
      %329 = vmatprep.subr.mxu0 0.0
      %330 = vmatpush1.msra.mxu0 0.0
      %331 = vmatprep.subr.mxu0 0.0
      %332 = vmatpush1.msra.mxu0 0.0
      %333 = vmatprep.subr.mxu0 0.0
      %334 = vmatpush1.msra.mxu0 0.0
      %335 = vmatprep.subr.mxu0 0.0
      %336 = vmatpush1.msra.mxu0 0.0
      %337 = vmatprep.subr.mxu0 0.0
      %338 = vmatpush1.msra.mxu0 0.0
      %339 = vmatprep.subr.mxu0 0.0
      %340 = vmatpush1.msra.mxu0 0.0
      %341 = vmatprep.subr.mxu0 0.0
      %342 = vmatpush1.msra.mxu0 0.0
      %343 = vmatprep.subr.mxu0 0.0
      %344 = vmatpush1.msra.mxu0 0.0
      %345 = vmatprep.subr.mxu0 0.0
      %346 = vmatpush1.msra.mxu0 0.0
      %347 = vmatprep.subr.mxu0 0.0
      %348 = vmatpush1.msra.mxu0 0.0
      %349 = vmatprep.subr.mxu0 0.0
      %350 = vmatpush1.msra.mxu0 0.0
      %351 = vmatprep.subr.mxu0 0.0
      %352 = vmatpush1.msra.mxu0 0.0
      %353 = vmatprep.subr.mxu0 0.0
      %354 = vmatpush1.msra.mxu0 0.0
      %355 = vmatprep.subr.mxu0 0.0
      %356 = vmatpush1.msra.mxu0 0.0
      %357 = vmatprep.subr.mxu0 0.0
      %358 = vmatpush1.msra.mxu0 0.0
      %359 = vmatprep.subr.mxu0 0.0
      %360 = vmatpush1.msra.mxu0 0.0
      %361 = vmatprep.subr.mxu0 0.0
      %362 = vmatpush1.msra.mxu0 0.0
      %363 = vmatprep.subr.mxu0 0.0
      %364 = vmatpush1.msra.mxu0 0.0
      %365 = vmatprep.mubr.f32.mxu0 0.0
      %366 = vmatmul.mubr.f32.gmra.mrb[0].mxu0 %v296
      %v367 = vpop.f32.mrb[0].mxu0
      %v368 = vadd.f32 0.0, %v367
      %v369 = vpop.f32.mrb[0].mxu0
      %v370 = vadd.f32 0.0, %v369
      %371 = vmatprep.mubr.f32.mxu0 0.0
      %372 = vmatmul.mubr.f32.gmra.mrb[0].mxu0 %v299
      %v373 = vpop.f32.mrb[0].mxu0
      %v374 = vadd.f32 0.0, %v373
      %v375 = vpop.f32.mrb[0].mxu0
      %v376 = vadd.f32 0.0, %v375
      %377 = vdwg.mxu0
      %v378 = vadd.f32 %v368, %v370
      %379 = vadd.xlane.f32.xlu0 %v378
      %v380 = vpop.xlane.xlu0 %379
      %v381 = vadd.f32 %v374, %v376
      %382 = vadd.xlane.f32.xlu0 %v381
      %v383 = vpop.xlane.xlu0 %382
      %v384 = vadd.f32 %v380, 0.0
      %v385 = vadd.f32 %v383, 0.0
      %v386 = vmul.f32 %v368, %v368
      %v387 = vmul.f32 %v370, %v370
      %v388 = vmul.f32 %v374, %v374
      %v389 = vmul.f32 %v376, %v376
      %v390 = vadd.f32 %v386, %v387
      %391 = vadd.xlane.f32.xlu0 %v390
      %v392 = vpop.xlane.xlu0 %391
      %v393 = vadd.f32 %v388, %v389
      %394 = vadd.xlane.f32.xlu0 %v393
      %v395 = vpop.xlane.xlu0 %394
      %v396 = vadd.f32 %v392, 0.0
      %v397 = vadd.f32 %v395, 0.0
      %vm398 = vcmask 7168
      %v399 = vsel %vm398, %v384, %v396
      %v400 = vsel %vm398, %v385, %v397
      %vm401 = vcmask 15360
      %402 = vst.msk [vmem:[%s143] sm:$0xff] %vm401, %v399
      %403 = vst.msk [vmem:[%s143 + $0x8] sm:$0xff] %vm401, %v400
      %p404 = scmp.lt.s32.totalorder %s13, 1
      %s405 = scalar_select %p404, %s13, 1
      %s406 = smul.addr %s405, 2
      %s407 = smul.addr %s406, 8
      %s408 = scalar_lea.vmem %s2, %s407
      // Predicated region
      $region29: #{conv_bn_relu.2} parent=27 // pred_check
        %p409 = pneg %p78
      $region30: #{conv_bn_relu.2} parent=27 // pred_check_branch
        %411 = sbr.rel (%p409) target = $region32
      $region31: #{conv_bn_relu.2} parent=27 // pred_region
        _
      $region32: #{conv_bn_relu.2} parent=27 // pred_fallthru
        _
    $region28: #{conv_bn_relu.2} parent=5 // pred_fallthru
      _
    %p412 = scmp.le.s32.totalorder 2, %s8
    // Predicated region
    $region33: #{conv_bn_relu.2} parent=5 // pred_check
      %p413 = pneg %p412
    $region34: #{conv_bn_relu.2} parent=5 // pred_check_branch
      %415 = sbr.rel (%p413) target = $region36
    $region35: #{conv_bn_relu.2} parent=5 // pred_region
      %s416 = ssub.s32 %s8, 2
      // Predicated region
      $region37: #{conv_bn_relu.2} parent=35 // pred_check
        %p417 = pneg %p84
      $region38: #{conv_bn_relu.2} parent=35 // pred_check_branch
        %419 = sbr.rel (%p417) target = $region40
      $region39: #{conv_bn_relu.2} parent=35 // pred_region
        %p420 = scmp.lt.s32.totalorder %s14, 1
        %s421 = scalar_select %p420, %s14, 1
        %s422 = smul.addr %s421, 2
        %s423 = smul.addr %s422, 8
        %s424 = scalar_lea.vmem %s2, %s423
      $region40: #{conv_bn_relu.2} parent=35 // pred_fallthru
        _
    $region36: #{conv_bn_relu.2} parent=5 // pred_fallthru
      _
  $region6: #{conv_bn_relu.2} parent=0 // loop_footer
    %s12 = sadd.s32 1, %s8
  $region7: #{conv_bn_relu.2} parent=0 // loop_footer_branch
    %7 = sbr.rel target = $region3
  $region8: #{conv_bn_relu.2} parent=0 // loop_exit
    _

// kernel: conv_bn_relu.3
$region0: #{conv_bn_relu.3}
  #allocation0 [shape = 'u32[]', space=smem, size = 0x4, offset = 0x4, fixed_abs, tag = 'smem constant byte address 0x4 - core index']
  #allocation1 [shape = 'u32[144,128]{1,0:T(1,128)}', space=vmem, size = 0x12000, scoped, tag = 'internal scratch']
  %s0 = inlined_call_operand.vmem [shape: f32[2,8,256], index: 0, kind: input, shape index: {}]
  %s1 = inlined_call_operand.vmem [shape: f32[16,72], index: 1, kind: input, shape index: {}]
  %s2 = inlined_call_operand.vmem [shape: f32[16,2], index: 2, kind: input, shape index: {}]
  %s3 = inlined_call_operand.vmem [shape: f32[16,1], index: 3, kind: input, shape index: {}]
  %s4 = inlined_call_operand.vmem [shape: f32[16,1], index: 4, kind: input, shape index: {}]
  %s5 = inlined_call_operand.vmem [shape: f32[2,16,256], index: 5, kind: output, shape index: {}]
  %s6 = sld [smem:[#allocation0]]
  $region53: #{conv_bn_relu.3} parent=0
    _
  %s8 = ssub.s32 1, %s6
  %s9 = scalar_select 0, %s8, %s6
  loop: start=0, step=1, limit=4
  $region2: #{conv_bn_relu.3} parent=0 // loop_pre_header
    _
  $region3: #{conv_bn_relu.3} parent=0 // loop_header
    %s11 = sphi 0, %s15
    %p12 = scmp.ge.s32.totalorder %s11, 4
    %s21 = sphi 0, %s23
    %s24 = sphi 0, %s21
    %s25 = sphi 0, %s24
    %s41 = sphi 0, %s25
    %s45 = sphi 0, %s45
    %s47 = sphi 0, %s45
    %s48 = sphi 0, %s47
    %s62 = sphi 0, %s48
    %s66 = sphi 0, %s66
    %s68 = sphi 0, %s66
    %s69 = sphi 0, %s68
    %s83 = sphi 0, %s69
    %s87 = sphi 0, %s87
    %s89 = sphi 0, %s87
    %s90 = sphi 0, %s89
    %s104 = sphi 0, %s90
    %s108 = sphi 0, %s108
    %s110 = sphi 0, %s108
    %s111 = sphi 0, %s110
    %s125 = sphi 0, %s111
    %s131 = sphi 0, %s133
    %s134 = sphi 0, %s131
    %s135 = sphi 0, %s134
    %s151 = sphi 0, %s135
  $region4: #{conv_bn_relu.3} parent=0 // loop_header_branch
    %14 = sbr.rel (%p12) target = $region8
  $region5: #{conv_bn_relu.3} parent=0 // loop_body
    %s16 = ssub.s32 %s11, 1
    %s17 = ssub.s32 %s11, 2
    %s18 = sadd.s32 %s11, 1
    %s19 = ssub.s32 %s11, %s18
    %p20 = scmp.eq.s32.totalorder %s19, 0
    %s22 = sadd.s32 %s21, 1
    %s23 = scalar_select %p20, %s21, %s22
    %p26 = pneg %p20
    %p27 = scmp.eq.s32.totalorder %s11, 1
    %p28 = por %p26, %p27
    %p29 = scmp.ne.s32.totalorder %s21, %s24
    %p30 = scmp.eq.s32.totalorder %s11, 0
    %p31 = por %p29, %p30
    %p32 = scmp.ne.s32.totalorder %s21, %s24
    %p33 = scmp.eq.s32.totalorder %s16, 1
    %p34 = por %p32, %p33
    %p35 = scmp.ne.s32.totalorder %s24, %s25
    %p36 = scmp.eq.s32.totalorder %s16, 0
    %p37 = por %p35, %p36
    %p38 = scmp.ne.s32.totalorder %s24, %s25
    %p39 = scmp.eq.s32.totalorder %s17, 1
    %p40 = por %p38, %p39
    %p42 = scmp.ne.s32.totalorder %s25, %s41
    %p43 = scmp.eq.s32.totalorder %s17, 0
    %p44 = por %p42, %p43
    %s46 = sadd.s32 %s45, 1
    %p49 = scmp.eq.s32.totalorder %s11, 1
    %p50 = scmp.ne.s32.totalorder %s45, %s47
    %p51 = scmp.eq.s32.totalorder %s11, 0
    %p52 = por %p50, %p51
    %p53 = scmp.ne.s32.totalorder %s45, %s47
    %p54 = scmp.eq.s32.totalorder %s16, 1
    %p55 = por %p53, %p54
    %p56 = scmp.ne.s32.totalorder %s47, %s48
    %p57 = scmp.eq.s32.totalorder %s16, 0
    %p58 = por %p56, %p57
    %p59 = scmp.ne.s32.totalorder %s47, %s48
    %p60 = scmp.eq.s32.totalorder %s17, 1
    %p61 = por %p59, %p60
    %p63 = scmp.ne.s32.totalorder %s48, %s62
    %p64 = scmp.eq.s32.totalorder %s17, 0
    %p65 = por %p63, %p64
    %s67 = sadd.s32 %s66, 1
    %p70 = scmp.eq.s32.totalorder %s11, 1
    %p71 = scmp.ne.s32.totalorder %s66, %s68
    %p72 = scmp.eq.s32.totalorder %s11, 0
    %p73 = por %p71, %p72
    %p74 = scmp.ne.s32.totalorder %s66, %s68
    %p75 = scmp.eq.s32.totalorder %s16, 1
    %p76 = por %p74, %p75
    %p77 = scmp.ne.s32.totalorder %s68, %s69
    %p78 = scmp.eq.s32.totalorder %s16, 0
    %p79 = por %p77, %p78
    %p80 = scmp.ne.s32.totalorder %s68, %s69
    %p81 = scmp.eq.s32.totalorder %s17, 1
    %p82 = por %p80, %p81
    %p84 = scmp.ne.s32.totalorder %s69, %s83
    %p85 = scmp.eq.s32.totalorder %s17, 0
    %p86 = por %p84, %p85
    %s88 = sadd.s32 %s87, 1
    %p91 = scmp.eq.s32.totalorder %s11, 1
    %p92 = scmp.ne.s32.totalorder %s87, %s89
    %p93 = scmp.eq.s32.totalorder %s11, 0
    %p94 = por %p92, %p93
    %p95 = scmp.ne.s32.totalorder %s87, %s89
    %p96 = scmp.eq.s32.totalorder %s16, 1
    %p97 = por %p95, %p96
    %p98 = scmp.ne.s32.totalorder %s89, %s90
    %p99 = scmp.eq.s32.totalorder %s16, 0
    %p100 = por %p98, %p99
    %p101 = scmp.ne.s32.totalorder %s89, %s90
    %p102 = scmp.eq.s32.totalorder %s17, 1
    %p103 = por %p101, %p102
    %p105 = scmp.ne.s32.totalorder %s90, %s104
    %p106 = scmp.eq.s32.totalorder %s17, 0
    %p107 = por %p105, %p106
    %s109 = sadd.s32 %s108, 1
    %p112 = scmp.eq.s32.totalorder %s11, 1
    %p113 = scmp.ne.s32.totalorder %s108, %s110
    %p114 = scmp.eq.s32.totalorder %s11, 0
    %p115 = por %p113, %p114
    %p116 = scmp.ne.s32.totalorder %s108, %s110
    %p117 = scmp.eq.s32.totalorder %s16, 1
    %p118 = por %p116, %p117
    %p119 = scmp.ne.s32.totalorder %s110, %s111
    %p120 = scmp.eq.s32.totalorder %s16, 0
    %p121 = por %p119, %p120
    %p122 = scmp.ne.s32.totalorder %s110, %s111
    %p123 = scmp.eq.s32.totalorder %s17, 1
    %p124 = por %p122, %p123
    %p126 = scmp.ne.s32.totalorder %s111, %s125
    %p127 = scmp.eq.s32.totalorder %s17, 0
    %p128 = por %p126, %p127
    %s129 = ssub.s32 %s11, %s18
    %p130 = scmp.eq.s32.totalorder %s129, 0
    %s132 = sadd.s32 %s131, 1
    %s133 = scalar_select %p130, %s131, %s132
    %p136 = pneg %p130
    %p137 = scmp.eq.s32.totalorder %s11, 1
    %p138 = por %p136, %p137
    %p139 = scmp.ne.s32.totalorder %s131, %s134
    %p140 = scmp.eq.s32.totalorder %s11, 0
    %p141 = por %p139, %p140
    %p142 = scmp.ne.s32.totalorder %s131, %s134
    %p143 = scmp.eq.s32.totalorder %s16, 1
    %p144 = por %p142, %p143
    %p145 = scmp.ne.s32.totalorder %s134, %s135
    %p146 = scmp.eq.s32.totalorder %s16, 0
    %p147 = por %p145, %p146
    %p148 = scmp.ne.s32.totalorder %s134, %s135
    %p149 = scmp.eq.s32.totalorder %s17, 1
    %p150 = por %p148, %p149
    %p152 = scmp.ne.s32.totalorder %s135, %s151
    %p153 = scmp.eq.s32.totalorder %s17, 0
    %p154 = por %p152, %p153
    %p155 = scmp.le.s32.totalorder 1, %s11
    %p156 = scmp.lt.s32.totalorder %s11, 3
    %p157 = pnand %p155, %p156
    %p158 = pneg %p157
    // Predicated region
    $region9: #{conv_bn_relu.3} parent=5 // pred_check
      _
    $region10: #{conv_bn_relu.3} parent=5 // pred_check_branch
      %160 = sbr.rel (%p157) target = $region12
    $region11: #{conv_bn_relu.3} parent=5 // pred_region
      %s161 = ssub.s32 %s11, 1
      // Predicated region
      $region13: #{conv_bn_relu.3} parent=11 // pred_check
        %p162 = pneg %p58
      $region14: #{conv_bn_relu.3} parent=11 // pred_check_branch
        %164 = sbr.rel (%p162) target = $region16
      $region15: #{conv_bn_relu.3} parent=11 // pred_region
        _
      $region16: #{conv_bn_relu.3} parent=11 // pred_fallthru
        _
      // Predicated region
      $region17: #{conv_bn_relu.3} parent=11 // pred_check
        %p165 = pneg %p79
      $region18: #{conv_bn_relu.3} parent=11 // pred_check_branch
        %167 = sbr.rel (%p165) target = $region20
      $region19: #{conv_bn_relu.3} parent=11 // pred_region
        _
      $region20: #{conv_bn_relu.3} parent=11 // pred_fallthru
        _
      // Predicated region
      $region21: #{conv_bn_relu.3} parent=11 // pred_check
        %p168 = pneg %p100
      $region22: #{conv_bn_relu.3} parent=11 // pred_check_branch
        %170 = sbr.rel (%p168) target = $region24
      $region23: #{conv_bn_relu.3} parent=11 // pred_region
        _
      $region24: #{conv_bn_relu.3} parent=11 // pred_fallthru
        _
      // Predicated region
      $region25: #{conv_bn_relu.3} parent=11 // pred_check
        %p171 = pneg %p121
      $region26: #{conv_bn_relu.3} parent=11 // pred_check_branch
        %173 = sbr.rel (%p171) target = $region28
      $region27: #{conv_bn_relu.3} parent=11 // pred_region
        _
      $region28: #{conv_bn_relu.3} parent=11 // pred_fallthru
        _
    $region12: #{conv_bn_relu.3} parent=5 // pred_fallthru
      _
    %p174 = scmp.lt.s32.totalorder %s11, 2
    // Predicated region
    $region29: #{conv_bn_relu.3} parent=5 // pred_check
      %p175 = pneg %p174
    $region30: #{conv_bn_relu.3} parent=5 // pred_check_branch
      %177 = sbr.rel (%p175) target = $region32
    $region31: #{conv_bn_relu.3} parent=5 // pred_region
      // Predicated region
      $region33: #{conv_bn_relu.3} parent=31 // pred_check
        %p178 = pneg %p31
      $region34: #{conv_bn_relu.3} parent=31 // pred_check_branch
        %180 = sbr.rel (%p178) target = $region36
      $region35: #{conv_bn_relu.3} parent=31 // pred_region
        %p181 = scmp.lt.s32.totalorder %s11, 1
        %s182 = scalar_select %p181, %s11, 1
        %s183 = smul.addr %s182, 2
        %s184 = smul.addr %s183, 8
        %s185 = scalar_lea.vmem %s0, %s184
      $region36: #{conv_bn_relu.3} parent=31 // pred_fallthru
        _
    $region32: #{conv_bn_relu.3} parent=5 // pred_fallthru
      _
    %p186 = scmp.le.s32.totalorder 1, %s11
    %p187 = scmp.lt.s32.totalorder %s11, 3
    %p188 = pnand %p186, %p187
    %p189 = pneg %p188
    // Predicated region
    $region37: #{conv_bn_relu.3} parent=5 // pred_check
      _
    $region38: #{conv_bn_relu.3} parent=5 // pred_check_branch
      %191 = sbr.rel (%p188) target = $region40
    $region39: #{conv_bn_relu.3} parent=5 // pred_region
      %s192 = ssub.s32 %s11, 1
      %p193 = scmp.lt.s32.totalorder %s16, 1
      %s194 = scalar_select %p193, %s16, 1
      %s195 = smul.addr %s194, 2
      %s196 = smul.addr %s195, 8
      %s197 = scalar_lea.vmem %s0, %s196
      %p198 = pneg %p37
      %p199 = pneg %p34
      %p200 = pneg %p58
      %p201 = pneg %p55
      %p202 = pneg %p79
      %p203 = pneg %p76
      %p204 = pneg %p100
      %p205 = pneg %p97
      %p206 = pneg %p121
      %p207 = pneg %p118
      %p208 = pneg %p147
      %p209 = pneg %p144
      %p210 = scmp.lt.s32.totalorder %s16, 1
      %s211 = scalar_select %p210, %s16, 1
      %s212 = smul.addr %s211, 4
      %s213 = smul.addr %s212, 8
      %s214 = scalar_lea.vmem %s5, %s213
      %p215 = scmp.lt.s32.totalorder %s16, 1
      %s216 = scalar_select %p215, %s16, 1
      %s217 = smul.addr %s216, 2
      %s218 = smul.addr %s217, 8
      %s219 = scalar_lea.vmem %s0, %s218
      %p220 = scmp.lt.s32.totalorder %s16, 1
      %s221 = scalar_select %p220, %s16, 1
      %s222 = smul.addr %s221, 4
      %s223 = smul.addr %s222, 8
      %s224 = scalar_lea.vmem %s5, %s223
      %v225 = vld [vmem:[%s1] sm:$0xff]
      %v226 = vld [vmem:[%s1 + $0x8] sm:$0xff]
      %v227 = vld [vmem:[%s2] sm:$0xff]
      %v228 = vld [vmem:[%s2 + $0x8] sm:$0xff]
      %v229 = vmul.f32 %v227, 0.001953125
      %v230 = vmul.f32 %v228, 0.001953125
      %v231 = vmul.f32 %v229, %v229
      %v232 = vmul.f32 %v230, %v230
      %235 = vrot.lane.b32.xlu0 %v231, 1
      %v236 = vpop.permute.xlu0 %235
      %237 = vrot.lane.b32.xlu0 %v232, 1
      %v238 = vpop.permute.xlu0 %237
      %v241 = vsub.f32 %v229, %v236
      %v242 = vsub.f32 %v230, %v238
      %v243 = vmax.f32 %v241, 0.0
      %v244 = vmax.f32 %v242, 0.0
      %v245 = vadd.f32 %v243, 1e-05
      %v246 = vadd.f32 %v244, 1e-05
      %v247 = vrsqrt.pop %v245
      %v248 = vrsqrt.pop %v246
      %v249 = vld [vmem:[%s3] sm:$0xff]
      %v250 = vld [vmem:[%s3 + $0x8] sm:$0xff]
      %253 = vrot.lane.b32.xlu0 %v247, 127
      %v254 = vpop.permute.xlu0 %253
      %255 = vrot.lane.b32.xlu0 %v248, 127
      %v256 = vpop.permute.xlu0 %255
      %v259 = vmul.f32 %v249, %v254
      %v260 = vmul.f32 %v250, %v256
      %v261 = vld [vmem:[%s4] sm:$0xff]
      %v262 = vld [vmem:[%s4 + $0x8] sm:$0xff]
      %v263 = vmul.f32 %v229, %v259
      %v264 = vmul.f32 %v230, %v260
      %v265 = vsub.f32 %v261, %v263
      %v266 = vsub.f32 %v262, %v264
      %v267 = vlaneseq
      %v268 = vand.u32 %v267, 127
      %v269 = vadd.s32 %v268, 128
      %vm270 = vcmp.lt.s32.totalorder %v268, 0
      %v271 = vsub.s32 0, %v268
      %v272 = vsel %vm270, %v271, %v268
      %v273 = vshrl.u32 %v272, 4
      %v274 = vand.u32 %v272, 15
      %v275 = vsub.s32 0, %v274
      %v276 = vsel %vm270, %v275, %v274
      %vm277 = vcmp.lt.s32.totalorder %v269, 0
      %v278 = vsub.s32 0, %v269
      %v279 = vsel %vm277, %v278, %v269
      %v280 = vshrl.u32 %v279, 4
      %v281 = vand.u32 %v279, 15
      %v282 = vsub.s32 0, %v281
      %v283 = vsel %vm277, %v282, %v281
      %vm284 = vcmp.ne.s32.totalorder %v276, 0
      %vm285 = vcmp.ne.s32.totalorder %v283, 0
      %vm286 = vcmp.lt.s32.totalorder %v276, 0
      %vm287 = vcmp.lt.s32.totalorder %v283, 0
      %vm288 = vmand %vm286, %vm284
      %vm289 = vmand %vm287, %vm285
      %v290 = vadd.s32 %v276, 16
      %v291 = vadd.s32 %v283, 16
      %v292 = vsel %vm288, %v290, %v276
      %v293 = vsel %vm289, %v291, %v283
      %vm294 = vcmp.ge.s32.totalorder %v292, 1
      %vm295 = vcmp.ge.s32.totalorder %v293, 1
      %vm296 = vcmp.le.s32.totalorder %v292, 14
      %vm297 = vcmp.le.s32.totalorder %v293, 14
      %v298 = vld [vmem:[%s219] sm:$0xff]
      %v299 = vld [vmem:[%s219 + $0x8] sm:$0xff]
      %302 = vrot.lane.b32.xlu0 %v298, 17
      %v303 = vpop.permute.xlu0 %302
      %304 = vrot.lane.b32.xlu0 %v299, 17
      %v305 = vpop.permute.xlu0 %304
      %vm306 = vcmask 138240
      %v307 = vsel %vm306, %v303, %v305
      %v311 = vsel %vm306, 0.0, %v303
      %v312 = vsel %vm306, %v305, 0.0
      %v313 = vsel %vm294, %v311, 0.0
      %v314 = vsel %vm295, %v307, 0.0
      %317 = vrot.lane.b32.xlu0 %v311, 126
      %v318 = vpop.permute.xlu0 %317
      %319 = vrot.lane.b32.xlu0 %v307, 126
      %v320 = vpop.permute.xlu0 %319
      %321 = vrot.lane.b32.xlu0 %v312, 126
      %v322 = vpop.permute.xlu0 %321
      %vm323 = vcmask 1031168
      %v324 = vsel %vm323, %v318, %v320
      %v325 = vsel %vm323, %v320, %v322
      %v328 = vsel %vm296, %v324, 0.0
      %v329 = vsel %vm297, %v325, 0.0
      %330 = vrot.lane.b32.xlu0 %v311, 112
      %v331 = vpop.permute.xlu0 %330
      %332 = vrot.lane.b32.xlu0 %v307, 112
      %v333 = vpop.permute.xlu0 %332
      %334 = vrot.lane.b32.xlu0 %v312, 112
      %v335 = vpop.permute.xlu0 %334
      %vm336 = vcmask 916480
      %v337 = vsel %vm336, %v331, %v333
      %v338 = vsel %vm336, %v333, %v335
      %v341 = vsel %vm294, %v337, 0.0
      %v342 = vsel %vm295, %v338, 0.0
      %343 = vrot.lane.b32.xlu0 %v311, 110
      %v344 = vpop.permute.xlu0 %343
      %345 = vrot.lane.b32.xlu0 %v307, 110
      %v346 = vpop.permute.xlu0 %345
      %347 = vrot.lane.b32.xlu0 %v312, 110
      %v348 = vpop.permute.xlu0 %347
      %vm349 = vcmask 900096
      %v350 = vsel %vm349, %v344, %v346
      %v351 = vsel %vm349, %v346, %v348
      %v354 = vsel %vm296, %v350, 0.0
      %v355 = vsel %vm297, %v351, 0.0
      %356 = vrot.lane.b32.xlu0 %v311, 96
      %v357 = vpop.permute.xlu0 %356
      %358 = vrot.lane.b32.xlu0 %v307, 96
      %v359 = vpop.permute.xlu0 %358
      %360 = vrot.lane.b32.xlu0 %v312, 96
      %v361 = vpop.permute.xlu0 %360
      %vm362 = vcmask 785408
      %v363 = vsel %vm362, %v357, %v359
      %v364 = vsel %vm362, %v359, %v361
      %v367 = vsel %vm294, %v363, 0.0
      %v368 = vsel %vm295, %v364, 0.0
      %369 = vrot.lane.b32.xlu0 %v311, 94
      %v370 = vpop.permute.xlu0 %369
      %371 = vrot.lane.b32.xlu0 %v307, 94
      %v372 = vpop.permute.xlu0 %371
      %373 = vrot.lane.b32.xlu0 %v312, 94
      %v374 = vpop.permute.xlu0 %373
      %vm375 = vcmask 769024
      %v376 = vsel %vm375, %v370, %v372
      %v377 = vsel %vm375, %v372, %v374
      %v380 = vsel %vm296, %v376, 0.0
      %v381 = vsel %vm297, %v377, 0.0
      %382 = vrot.lane.b32.xlu0 %v311, 127
      %v383 = vpop.permute.xlu0 %382
      %384 = vrot.lane.b32.xlu0 %v307, 127
      %v385 = vpop.permute.xlu0 %384
      %386 = vrot.lane.b32.xlu0 %v312, 127
      %v387 = vpop.permute.xlu0 %386
      %vm388 = vcmask 1039360
      %v389 = vsel %vm388, %v383, %v385
      %v390 = vsel %vm388, %v385, %v387
      %393 = vrot.lane.b32.xlu0 %v311, 111
      %v394 = vpop.permute.xlu0 %393
      %395 = vrot.lane.b32.xlu0 %v307, 111
      %v396 = vpop.permute.xlu0 %395
      %397 = vrot.lane.b32.xlu0 %v312, 111
      %v398 = vpop.permute.xlu0 %397
      %vm399 = vcmask 908288
      %v400 = vsel %vm399, %v394, %v396
      %v401 = vsel %vm399, %v396, %v398
      %404 = vrot.lane.b32.xlu0 %v311, 95
      %v405 = vpop.permute.xlu0 %404
      %406 = vrot.lane.b32.xlu0 %v307, 95
      %v407 = vpop.permute.xlu0 %406
      %408 = vrot.lane.b32.xlu0 %v312, 95
      %v409 = vpop.permute.xlu0 %408
      %vm410 = vcmask 777216
      %v411 = vsel %vm410, %v405, %v407
      %v412 = vsel %vm410, %v407, %v409
      %vm415 = vcmask 588800
      %v417 = vsel %vm415, %v225, 0
      %v420 = vsel %vm415, %v226, 0
      %422 = vmatprep.subr.mxu0 %v314
      %423 = vmatpush1.msra.mxu0 %v313
      %424 = vmatprep.subr.mxu0 %v390
      %425 = vmatpush1.msra.mxu0 %v389
      %426 = vmatprep.subr.mxu0 %v329
      %427 = vmatpush1.msra.mxu0 %v328
      %428 = vmatprep.subr.mxu0 %v342
      %429 = vmatpush1.msra.mxu0 %v341
      %430 = vmatprep.subr.mxu0 %v401
      %431 = vmatpush1.msra.mxu0 %v400
      %432 = vmatprep.subr.mxu0 %v355
      %433 = vmatpush1.msra.mxu0 %v354
      %434 = vmatprep.subr.mxu0 %v368
      %435 = vmatpush1.msra.mxu0 %v367
      %436 = vmatprep.subr.mxu0 %v412
      %437 = vmatpush1.msra.mxu0 %v411
      %438 = vmatprep.subr.mxu0 %v381
      %439 = vmatpush1.msra.mxu0 %v380
      %440 = vmatprep.subr.mxu0 0.0
      %441 = vmatpush1.msra.mxu0 0.0
      %442 = vmatprep.subr.mxu0 0.0
      %443 = vmatpush1.msra.mxu0 0.0
      %444 = vmatprep.subr.mxu0 0.0
      %445 = vmatpush1.msra.mxu0 0.0
      %446 = vmatprep.subr.mxu0 0.0
      %447 = vmatpush1.msra.mxu0 0.0
      %448 = vmatprep.subr.mxu0 0.0
      %449 = vmatpush1.msra.mxu0 0.0
      %450 = vmatprep.subr.mxu0 0.0
      %451 = vmatpush1.msra.mxu0 0.0
      %452 = vmatprep.subr.mxu0 0.0
      %453 = vmatpush1.msra.mxu0 0.0
      %454 = vmatprep.subr.mxu0 0.0
      %455 = vmatpush1.msra.mxu0 0.0
      %456 = vmatprep.subr.mxu0 0.0
      %457 = vmatpush1.msra.mxu0 0.0
      %458 = vmatprep.subr.mxu0 0.0
      %459 = vmatpush1.msra.mxu0 0.0
      %460 = vmatprep.subr.mxu0 0.0
      %461 = vmatpush1.msra.mxu0 0.0
      %462 = vmatprep.subr.mxu0 0.0
      %463 = vmatpush1.msra.mxu0 0.0
      %464 = vmatprep.subr.mxu0 0.0
      %465 = vmatpush1.msra.mxu0 0.0
      %466 = vmatprep.subr.mxu0 0.0
      %467 = vmatpush1.msra.mxu0 0.0
      %468 = vmatprep.subr.mxu0 0.0
      %469 = vmatpush1.msra.mxu0 0.0
      %470 = vmatprep.subr.mxu0 0.0
      %471 = vmatpush1.msra.mxu0 0.0
      %472 = vmatprep.subr.mxu0 0.0
      %473 = vmatpush1.msra.mxu0 0.0
      %474 = vmatprep.subr.mxu0 0.0
      %475 = vmatpush1.msra.mxu0 0.0
      %476 = vmatprep.subr.mxu0 0.0
      %477 = vmatpush1.msra.mxu0 0.0
      %478 = vmatprep.subr.mxu0 0.0
      %479 = vmatpush1.msra.mxu0 0.0
      %480 = vmatprep.subr.mxu0 0.0
      %481 = vmatpush1.msra.mxu0 0.0
      %482 = vmatprep.subr.mxu0 0.0
      %483 = vmatpush1.msra.mxu0 0.0
      %484 = vmatprep.subr.mxu0 0.0
      %485 = vmatpush1.msra.mxu0 0.0
      %486 = vmatprep.mubr.f32.mxu0 0.0
      %487 = vmatmul.mubr.f32.gmra.mrb[0].mxu0 %v417
      %v488 = vpop.f32.mrb[0].mxu0
      %v489 = vadd.f32 0.0, %v488
      %v490 = vpop.f32.mrb[0].mxu0
      %v491 = vadd.f32 0.0, %v490
      %492 = vmatprep.mubr.f32.mxu0 0.0
      %493 = vmatmul.mubr.f32.gmra.mrb[0].mxu0 %v420
      %v494 = vpop.f32.mrb[0].mxu0
      %v495 = vadd.f32 0.0, %v494
      %v496 = vpop.f32.mrb[0].mxu0
      %v497 = vadd.f32 0.0, %v496
      %498 = vdwg.mxu0
      %500 = vset.pattern.permute.xlu0 0
      %501 = vperm.xlu0 %500, %v259
      %v502 = vpop.permute.xlu0 %501
      %505 = vset.pattern.permute.xlu0 0
      %506 = vperm.xlu0 %505, %v260
      %v507 = vpop.permute.xlu0 %506
      %v509 = vmul.f32 %v489, %v502
      %v510 = vmul.f32 %v491, %v502
      %v511 = vmul.f32 %v495, %v507
      %v512 = vmul.f32 %v497, %v507
      %514 = vset.pattern.permute.xlu0 0
      %515 = vperm.xlu0 %514, %v265
      %v516 = vpop.permute.xlu0 %515
      %519 = vset.pattern.permute.xlu0 0
      %520 = vperm.xlu0 %519, %v266
      %v521 = vpop.permute.xlu0 %520
      %v523 = vadd.f32 %v509, %v516
      %v524 = vadd.f32 %v510, %v516
      %v525 = vadd.f32 %v511, %v521
      %v526 = vadd.f32 %v512, %v521
      %v527 = vmax.f32 %v523, 0.0
      %v528 = vmax.f32 %v524, 0.0
      %v529 = vmax.f32 %v525, 0.0
      %v530 = vmax.f32 %v526, 0.0
      %531 = vst [vmem:[%s224] sm:$0xff] %v527
      %532 = vst [vmem:[%s224 + $0x8] sm:$0xff] %v528
      %533 = vst [vmem:[%s224 + $0x10] sm:$0xff] %v529
      %534 = vst [vmem:[%s224 + $0x18] sm:$0xff] %v530
      %p535 = scmp.lt.s32.totalorder %s16, 1
      %s536 = scalar_select %p535, %s16, 1
      %s537 = smul.addr %s536, 4
      %s538 = smul.addr %s537, 8
      %s539 = scalar_lea.vmem %s5, %s538
      // Predicated region
      $region41: #{conv_bn_relu.3} parent=39 // pred_check
        %p540 = pneg %p144
      $region42: #{conv_bn_relu.3} parent=39 // pred_check_branch
        %542 = sbr.rel (%p540) target = $region44
      $region43: #{conv_bn_relu.3} parent=39 // pred_region
        _
      $region44: #{conv_bn_relu.3} parent=39 // pred_fallthru
        _
    $region40: #{conv_bn_relu.3} parent=5 // pred_fallthru
      _
    %p543 = scmp.le.s32.totalorder 2, %s11
    // Predicated region
    $region45: #{conv_bn_relu.3} parent=5 // pred_check
      %p544 = pneg %p543
    $region46: #{conv_bn_relu.3} parent=5 // pred_check_branch
      %546 = sbr.rel (%p544) target = $region48
    $region47: #{conv_bn_relu.3} parent=5 // pred_region
      %s547 = ssub.s32 %s11, 2
      // Predicated region
      $region49: #{conv_bn_relu.3} parent=47 // pred_check
        %p548 = pneg %p150
      $region50: #{conv_bn_relu.3} parent=47 // pred_check_branch
        %550 = sbr.rel (%p548) target = $region52
      $region51: #{conv_bn_relu.3} parent=47 // pred_region
        %p551 = scmp.lt.s32.totalorder %s17, 1
        %s552 = scalar_select %p551, %s17, 1
        %s553 = smul.addr %s552, 4
        %s554 = smul.addr %s553, 8
        %s555 = scalar_lea.vmem %s5, %s554
      $region52: #{conv_bn_relu.3} parent=47 // pred_fallthru
        _
    $region48: #{conv_bn_relu.3} parent=5 // pred_fallthru
      _
  $region6: #{conv_bn_relu.3} parent=0 // loop_footer
    %s15 = sadd.s32 1, %s11
  $region7: #{conv_bn_relu.3} parent=0 // loop_footer_branch
    %10 = sbr.rel target = $region3
  $region8: #{conv_bn_relu.3} parent=0 // loop_exit
    _

</llo_original>
